<compile_context>
chip_gen: v7x
topology: tpu7x:2x2x1
jax: 0.10.0
libtpu: 0.0.40
codegen_flags: <defaults>
</compile_context>

<pallas_src>
import functools

import jax
import jax.numpy as jnp
from jax.experimental import pallas as pl
from jax.experimental.pallas import tpu as pltpu


def _round_up(x, m):
    return (x + m - 1) // m * m


# --------------------------------------------------------------------------
# Pallas kernel 1: GEMM with VMEM-resident weights, fused bias (+ ReLU)
#   A (Mp, Kp) bf16 streamed in tm-row blocks, B (Kp, Np) bf16 resident,
#   f32 accumulation on the MXU, bf16 output.
# --------------------------------------------------------------------------
def _matmul_bias_act_kernel(a_ref, b_ref, bias_ref, o_ref, *, apply_relu):
    acc = jnp.dot(a_ref[...], b_ref[...], preferred_element_type=jnp.float32)
    out = acc + bias_ref[...]
    if apply_relu:
        out = jnp.maximum(out, 0.0)
    o_ref[...] = out.astype(o_ref.dtype)


def pallas_matmul_bias_act(a, b, bias, apply_relu):
    """out = act(a @ b + bias); a:(M,K) bf16, b:(K,N) bf16, bias:(N,) f32."""
    M, K = a.shape
    Kb, N = b.shape
    assert K == Kb
    Kp = _round_up(K, 128)          # aligned contraction
    Np = _round_up(N, 128)          # lane-dense output stores

    # M tile: >=2 blocks when possible (two v7x TensorCores), 256/512-aligned
    # for large M (v6e 256x256 MXU), always sublane-aligned.
    if M >= 2048:
        tm = 512
    elif M >= 512:
        tm = 256
    elif M >= 16:
        tm = _round_up(pl.cdiv(M, 2), 16)
    else:
        tm = 16
    Mp = _round_up(M, tm)

    a_p = a if (Mp == M and Kp == K) else jnp.pad(a, ((0, Mp - M), (0, Kp - K)))
    b_p = b if (Kp == K and Np == N) else jnp.pad(b, ((0, Kp - K), (0, Np - N)))
    bias_p = jnp.pad(bias.astype(jnp.float32), (0, Np - N)).reshape(1, Np)

    kernel = functools.partial(_matmul_bias_act_kernel, apply_relu=apply_relu)
    out = pl.pallas_call(
        kernel,
        out_shape=jax.ShapeDtypeStruct((Mp, Np), jnp.bfloat16),
        grid_spec=pltpu.PrefetchScalarGridSpec(
            num_scalar_prefetch=0,
            grid=(Mp // tm,),
            in_specs=[
                pl.BlockSpec((tm, Kp), lambda i: (i, 0)),  # streamed A rows
                pl.BlockSpec((Kp, Np), lambda i: (0, 0)),  # VMEM-resident weights
                pl.BlockSpec((1, Np), lambda i: (0, 0)),   # resident bias
            ],
            out_specs=pl.BlockSpec((tm, Np), lambda i: (i, 0)),
        ),
        compiler_params=pltpu.CompilerParams(
            dimension_semantics=("parallel",),
            vmem_limit_bytes=32 * 1024 * 1024),
    )(a_p, b_p, bias_p)
    return out[:M, :N]


# --------------------------------------------------------------------------
# Pallas kernel 2: 3x3 / stride-2 max-pool (one HBM read per activation tile,
# all 9 taps reduced in vregs).
# --------------------------------------------------------------------------
def _maxpool_kernel(x_ref, o_ref, *, k, s):
    _, OH, OW, _ = o_ref.shape
    x = x_ref[0]                                           # (Hin, Win, C), read once
    # Pool along W: one statically-indexed window per output column.
    cols = [jnp.max(x[:, s * ow:s * ow + k, :], axis=1, keepdims=True)
            for ow in range(OW)]
    y = jnp.concatenate(cols, axis=1)                      # (Hin, OW, C)
    # Pool along H.
    rows = [jnp.max(y[s * oh:s * oh + k], axis=0, keepdims=True)
            for oh in range(OH)]
    o_ref[0] = jnp.concatenate(rows, axis=0)               # (OH, OW, C)


def pallas_maxpool2d(x, k=3, s=2):
    # x: (S, H, W, C) bf16
    S, H, W, C = x.shape
    OH = (H - k) // s + 1
    OW = (W - k) // s + 1
    kernel = functools.partial(_maxpool_kernel, k=k, s=s)
    return pl.pallas_call(
        kernel,
        out_shape=jax.ShapeDtypeStruct((S, OH, OW, C), x.dtype),
        grid=(S,),
        in_specs=[pl.BlockSpec((1, H, W, C), lambda i: (i, 0, 0, 0))],
        out_specs=pl.BlockSpec((1, OH, OW, C), lambda i: (i, 0, 0, 0)),
        compiler_params=pltpu.CompilerParams(dimension_semantics=("parallel",)),
    )(x)


# --------------------------------------------------------------------------
# Pallas kernel 3: fused head
#   AdaptiveAvgPool2d(1) -> flatten -> max over slice dim -> Linear(256, 1)
# --------------------------------------------------------------------------
def _head_kernel(f_ref, w_ref, b_ref, o_ref):
    f = f_ref[...].astype(jnp.float32)                    # (S, HW, C)
    pooled = jnp.mean(f, axis=1)                          # (S, C)   avg pool -> 1x1
    pooled_max = jnp.max(pooled, axis=0, keepdims=True)   # (1, C)   max over slices
    logit = jnp.sum(pooled_max * w_ref[...], axis=-1, keepdims=True) + b_ref[...]
    o_ref[...] = logit                                    # (1, 1)


def pallas_head(features, fc_w, fc_b):
    # features: (S, HW, C) bf16 ; fc_w: (1, C) f32 ; fc_b: (1, 1) f32
    S, HW, C = features.shape
    return pl.pallas_call(
        _head_kernel,
        out_shape=jax.ShapeDtypeStruct((1, 1), jnp.float32),
        grid=(1,),
        in_specs=[
            pl.BlockSpec((S, HW, C), lambda i: (0, 0, 0)),
            pl.BlockSpec((1, C), lambda i: (0, 0)),
            pl.BlockSpec((1, 1), lambda i: (0, 0)),
        ],
        out_specs=pl.BlockSpec((1, 1), lambda i: (0, 0)),
    )(features, fc_w, fc_b)


# --------------------------------------------------------------------------
# JAX glue: patch extraction (im2col) and conv wrapper.
# TODO(synk): the im2col patch matrix is still materialized in HBM (KH*KW
# activation inflation); a fully fused shift-GEMM / direct-conv kernel would
# stream the NHWC activation directly and remove that traffic.
# --------------------------------------------------------------------------
def extract_patches(x, kh, kw, stride, pad):
    """x: (N, H, W, C) bf16 -> (N*OH*OW, kh*kw*C) with (i, j, c) minor order."""
    if pad:
        x = jnp.pad(x, ((0, 0), (pad, pad), (pad, pad), (0, 0)))
    N, H, W, C = x.shape
    OH = (H - kh) // stride + 1
    OW = (W - kw) // stride + 1
    rows = [x[:, i:i + stride * (OH - 1) + 1:stride, :, :] for i in range(kh)]
    xh = jnp.stack(rows, axis=2)                         # (N, OH, kh, W, C)
    cols = [xh[:, :, :, j:j + stride * (OW - 1) + 1:stride, :] for j in range(kw)]
    xw = jnp.stack(cols, axis=4)                         # (N, OH, kh, OW, kw, C)
    patches = jnp.transpose(xw, (0, 1, 3, 2, 4, 5))      # (N, OH, OW, kh, kw, C)
    return patches.reshape(N * OH * OW, kh * kw * C), OH, OW


def conv2d_relu(x, w, b, stride, pad):
    # x: (N, H, W, C) bf16 ; w: (OC, IC, KH, KW) f32 (PyTorch layout) ; b: (OC,) f32
    OC, IC, KH, KW = w.shape
    patches, OH, OW = extract_patches(x, KH, KW, stride, pad)
    w_mat = jnp.transpose(w, (2, 3, 1, 0)).reshape(KH * KW * IC, OC)
    w_mat = w_mat.astype(jnp.bfloat16)
    out = pallas_matmul_bias_act(patches, w_mat, b, apply_relu=True)
    return out.reshape(x.shape[0], OH, OW, OC)


# --------------------------------------------------------------------------
# Parameters (deterministic init; AlexNet `features` + Linear(256, 1))
# --------------------------------------------------------------------------
def init_params(key):
    cfgs = [  # (OC, IC, KH, KW, stride, pad) -- torchvision AlexNet .features
        (64, 3, 11, 11, 4, 2),
        (192, 64, 5, 5, 1, 2),
        (384, 192, 3, 3, 1, 1),
        (256, 384, 3, 3, 1, 1),
        (256, 256, 3, 3, 1, 1),
    ]
    conv_params = []
    for (oc, ic, kh, kw, st, pd) in cfgs:
        key, k_w, k_b = jax.random.split(key, 3)
        fan_in = ic * kh * kw
        w = jax.random.normal(k_w, (oc, ic, kh, kw), jnp.float32) / jnp.sqrt(fan_in)
        b = jax.random.normal(k_b, (oc,), jnp.float32) * 0.01
        conv_params.append((w, b, st, pd))
    key, k_fw, k_fb = jax.random.split(key, 3)
    fc_w = jax.random.normal(k_fw, (1, 256), jnp.float32) / 16.0   # Linear(256, 1)
    fc_b = jax.random.normal(k_fb, (1, 1), jnp.float32) * 0.01
    return conv_params, fc_w, fc_b


# --------------------------------------------------------------------------
# Full forward (matches StanfordMRNet.forward semantics)
# --------------------------------------------------------------------------
def stanford_mrnet_forward(x, conv_params, fc_w, fc_b):
    # x: (1, S, 3, H, W)  (PyTorch NCHW slices with leading dummy batch dim)
    x = jnp.squeeze(x, axis=0)                      # torch.squeeze(x, dim=0)
    x = jnp.transpose(x, (0, 2, 3, 1))              # NCHW -> NHWC
    x = x.astype(jnp.bfloat16)                      # bf16 activations end-to-end

    # AlexNet feature extractor (.features): conv+relu / maxpool stack
    w, b, st, pd = conv_params[0]
    x = pallas_maxpool2d(conv2d_relu(x, w, b, st, pd))
    w, b, st, pd = conv_params[1]
    x = pallas_maxpool2d(conv2d_relu(x, w, b, st, pd))
    w, b, st, pd = conv_params[2]
    x = conv2d_relu(x, w, b, st, pd)
    w, b, st, pd = conv_params[3]
    x = conv2d_relu(x, w, b, st, pd)
    w, b, st, pd = conv_params[4]
    x = pallas_maxpool2d(conv2d_relu(x, w, b, st, pd))  # (S, Hf, Wf, 256)

    S, Hf, Wf, C = x.shape
    feats = x.reshape(S, Hf * Wf, C)                # spatial flattened for the head
    return pallas_head(feats, fc_w, fc_b)           # (1, 1) logits


if __name__ == "__main__":
    key = jax.random.PRNGKey(0)
    p_key, x_key = jax.random.split(key)
    conv_params, fc_w, fc_b = init_params(p_key)

    # Smallest sensible input: 2 MR slices, 3 channels, 64x64 spatial (64 keeps
    # the AlexNet feature map non-degenerate -> 1x1x256 after the last pool).
    x = jax.random.normal(x_key, (1, 2, 3, 64, 64), jnp.float32)

    out = stanford_mrnet_forward(x, conv_params, fc_w, fc_b)
    out = jax.block_until_ready(out)
    assert out.shape == (1, 1) and out.dtype == jnp.float32
    print("KERNEL_OK")
</pallas_src>

<mosaic_0001>
module attributes {stable_mosaic.version = 11 : i64} {
  func.func @_matmul_bias_act_kernel(%arg0: i32, %arg1: memref<240x384xbf16, #tpu.memory_space<vmem>>, %arg2: memref<384x128xbf16, #tpu.memory_space<vmem>>, %arg3: memref<1x128xf32, #tpu.memory_space<vmem>>, %arg4: memref<240x128xbf16, #tpu.memory_space<vmem>>) attributes {dimension_semantics = [#tpu.dimension_semantics<parallel>], iteration_bounds = array<i64: 2>, scalar_prefetch = 0 : i64, scratch_operands = 0 : i64, tpu.core_type = #tpu.core_type<tc>, window_params = [{transform_indices = @transform_0, window_bounds = array<i64: 240, 384>}, {pipeline_mode = #tpu.pipeline_mode<synchronous>, transform_indices = @transform_1, window_bounds = array<i64: 384, 128>}, {pipeline_mode = #tpu.pipeline_mode<synchronous>, transform_indices = @transform_2, window_bounds = array<i64: 1, 128>}, {transform_indices = @transform_3, window_bounds = array<i64: 240, 128>}]} {
    %c0 = arith.constant 0 : index
    %c0_0 = arith.constant 0 : index
    %0 = vector.load %arg1[%c0, %c0_0] : memref<240x384xbf16, #tpu.memory_space<vmem>>, vector<240x384xbf16>
    %c0_1 = arith.constant 0 : index
    %c0_2 = arith.constant 0 : index
    %1 = vector.load %arg2[%c0_1, %c0_2] : memref<384x128xbf16, #tpu.memory_space<vmem>>, vector<384x128xbf16>
    %cst = arith.constant dense<0.000000e+00> : vector<240x128xf32>
    %2 = tpu.matmul %0, %1, %cst {dimension_numbers = #tpu.dot_dimension_numbers<[1], [0], [0], [1], [0, 0, 1, 1], [], []>} : vector<240x384xbf16>, vector<384x128xbf16>, vector<240x128xf32> -> vector<240x128xf32>
    %c0_3 = arith.constant 0 : index
    %c0_4 = arith.constant 0 : index
    %3 = vector.load %arg3[%c0_3, %c0_4] : memref<1x128xf32, #tpu.memory_space<vmem>>, vector<1x128xf32>
    %4 = vector.broadcast %3 : vector<1x128xf32> to vector<240x128xf32>
    %5 = arith.addf %2, %4 : vector<240x128xf32>
    %cst_5 = arith.constant 0.000000e+00 : f32
    %6 = vector.broadcast %cst_5 : f32 to vector<240x128xf32>
    %7 = arith.maximumf %5, %6 : vector<240x128xf32>
    %8 = arith.truncf %7 : vector<240x128xf32> to vector<240x128xbf16>
    %c0_6 = arith.constant 0 : index
    %c0_7 = arith.constant 0 : index
    %9 = vector.load %arg4[%c0_6, %c0_7] : memref<240x128xbf16, #tpu.memory_space<vmem>>, vector<240x128xbf16>
    tpu.vector_store %arg4[%c0_6, %c0_7], %8 {strides = array<i32>} : memref<240x128xbf16, #tpu.memory_space<vmem>>, vector<240x128xbf16>,
    return
  }
  func.func @transform_0(%arg0: i32) -> (i32, i32) {
    %c0_i32 = arith.constant 0 : i32
    %c0_i32_0 = arith.constant 0 : i32
    return %arg0, %c0_i32 : i32, i32
  }
  func.func @transform_1(%arg0: i32) -> (i32, i32) {
    %c0_i32 = arith.constant 0 : i32
    %c0_i32_0 = arith.constant 0 : i32
    %c0_i32_1 = arith.constant 0 : i32
    return %c0_i32, %c0_i32_0 : i32, i32
  }
  func.func @transform_2(%arg0: i32) -> (i32, i32) {
    %c0_i32 = arith.constant 0 : i32
    %c0_i32_0 = arith.constant 0 : i32
    %c0_i32_1 = arith.constant 0 : i32
    return %c0_i32, %c0_i32_0 : i32, i32
  }
  func.func @transform_3(%arg0: i32) -> (i32, i32) {
    %c0_i32 = arith.constant 0 : i32
    %c0_i32_0 = arith.constant 0 : i32
    return %arg0, %c0_i32 : i32, i32
  }
}

</mosaic_0001>

<llo_original>
// kernel: tpu_custom_call.1
$region0: #{tpu_custom_call.1}
  #allocation0 [shape = 'u32[]', space=smem, size = 0x4, offset = 0x4, fixed_abs, tag = 'smem constant byte address 0x4 - core index']
  #allocation1 [shape = 'u32[144,128]{1,0:T(1,128)}', space=vmem, size = 0x12000, scoped, tag = 'internal scratch']
  %s0 = inlined_call_operand.hbm [shape: bf16[480,384], index: 0, kind: input, shape index: {}]
  %s1 = inlined_call_operand.hbm [shape: bf16[384,128], index: 1, kind: input, shape index: {}]
  %s2 = inlined_call_operand.vmem [shape: f32[1,128], index: 2, kind: input, shape index: {}]
  %s3 = inlined_call_operand.hbm [shape: bf16[480,128], index: 3, kind: output, shape index: {}]
  %s4 = sld [smem:[#allocation0]]
  $region53: #{tpu_custom_call.1} parent=0
    _
  %s6 = ssub.s32 1, %s4
  %s7 = scalar_select 0, %s6, %s4
  $region1: #{tpu_custom_call.1} parent=0
    #allocation2 [shape = 'u8[368640]{0}', space=vmem, size = 0x5a000, scoped, tag = 'input window, operand 0']
    #allocation3 [shape = 's32[2]{0}', space=sflag, size = 0x8, scoped, tag = 'scoped memory for tpu_custom_call.1']
    #allocation4 [shape = 's32[2]{0}', space=sflag, size = 0x8, scoped, tag = 'scoped memory for tpu_custom_call.1']
    #allocation5 [shape = 'u8[98304]{0}', space=vmem, size = 0x18000, scoped, tag = 'input window, operand 1, single buffered']
    #allocation6 [shape = 's32[1]{0}', space=sflag, size = 0x4, scoped, tag = 'scoped memory for tpu_custom_call.1']
    #allocation7 [shape = 'u8[122880]{0}', space=vmem, size = 0x1e000, scoped, tag = 'output window, operand 0']
    %8 = vsyncpa [#allocation3], 0
    %s9 = scalar_lea.sflag [#allocation3], 1
    %10 = vsyncpa %s9, 0
    %11 = vsyncpa [#allocation6], 0
    %12 = vsyncpa [#allocation4], 0
    %s13 = scalar_lea.sflag [#allocation4], 1
    %14 = vsyncpa %s13, 0
    loop: start=0, step=1, limit=4
    $region2: #{tpu_custom_call.1} parent=1 // loop_pre_header
      _
    $region3: #{tpu_custom_call.1} parent=1 // loop_header
      %s16 = sphi 0, %s20
      %p17 = scmp.ge.s32.totalorder %s16, 4
      %s26 = sphi 0, %s28
      %s29 = sphi 0, %s26
      %s30 = sphi 0, %s29
      %s46 = sphi 0, %s30
      %s50 = sphi 0, %s50
      %s52 = sphi 0, %s50
      %s53 = sphi 0, %s52
      %s67 = sphi 0, %s53
      %s71 = sphi 0, %s71
      %s73 = sphi 0, %s71
      %s74 = sphi 0, %s73
      %s88 = sphi 0, %s74
      %s94 = sphi 0, %s96
      %s97 = sphi 0, %s94
      %s98 = sphi 0, %s97
      %s114 = sphi 0, %s98
    $region4: #{tpu_custom_call.1} parent=1 // loop_header_branch
      %19 = sbr.rel (%p17) target = $region8
    $region5: #{tpu_custom_call.1} parent=1 // loop_body
      %s21 = ssub.s32 %s16, 1
      %s22 = ssub.s32 %s16, 2
      %s23 = sadd.s32 %s16, 1
      %s24 = ssub.s32 %s16, %s23
      %p25 = scmp.eq.s32.totalorder %s24, 0
      %s27 = sadd.s32 %s26, 1
      %s28 = scalar_select %p25, %s26, %s27
      %p31 = pneg %p25
      %p32 = scmp.eq.s32.totalorder %s16, 1
      %p33 = por %p31, %p32
      %p34 = scmp.ne.s32.totalorder %s26, %s29
      %p35 = scmp.eq.s32.totalorder %s16, 0
      %p36 = por %p34, %p35
      %p37 = scmp.ne.s32.totalorder %s26, %s29
      %p38 = scmp.eq.s32.totalorder %s21, 1
      %p39 = por %p37, %p38
      %p40 = scmp.ne.s32.totalorder %s29, %s30
      %p41 = scmp.eq.s32.totalorder %s21, 0
      %p42 = por %p40, %p41
      %p43 = scmp.ne.s32.totalorder %s29, %s30
      %p44 = scmp.eq.s32.totalorder %s22, 1
      %p45 = por %p43, %p44
      %p47 = scmp.ne.s32.totalorder %s30, %s46
      %p48 = scmp.eq.s32.totalorder %s22, 0
      %p49 = por %p47, %p48
      %s51 = sadd.s32 %s50, 1
      %p54 = scmp.eq.s32.totalorder %s16, 1
      %p55 = scmp.ne.s32.totalorder %s50, %s52
      %p56 = scmp.eq.s32.totalorder %s16, 0
      %p57 = por %p55, %p56
      %p58 = scmp.ne.s32.totalorder %s50, %s52
      %p59 = scmp.eq.s32.totalorder %s21, 1
      %p60 = por %p58, %p59
      %p61 = scmp.ne.s32.totalorder %s52, %s53
      %p62 = scmp.eq.s32.totalorder %s21, 0
      %p63 = por %p61, %p62
      %p64 = scmp.ne.s32.totalorder %s52, %s53
      %p65 = scmp.eq.s32.totalorder %s22, 1
      %p66 = por %p64, %p65
      %p68 = scmp.ne.s32.totalorder %s53, %s67
      %p69 = scmp.eq.s32.totalorder %s22, 0
      %p70 = por %p68, %p69
      %s72 = sadd.s32 %s71, 1
      %p75 = scmp.eq.s32.totalorder %s16, 1
      %p76 = scmp.ne.s32.totalorder %s71, %s73
      %p77 = scmp.eq.s32.totalorder %s16, 0
      %p78 = por %p76, %p77
      %p79 = scmp.ne.s32.totalorder %s71, %s73
      %p80 = scmp.eq.s32.totalorder %s21, 1
      %p81 = por %p79, %p80
      %p82 = scmp.ne.s32.totalorder %s73, %s74
      %p83 = scmp.eq.s32.totalorder %s21, 0
      %p84 = por %p82, %p83
      %p85 = scmp.ne.s32.totalorder %s73, %s74
      %p86 = scmp.eq.s32.totalorder %s22, 1
      %p87 = por %p85, %p86
      %p89 = scmp.ne.s32.totalorder %s74, %s88
      %p90 = scmp.eq.s32.totalorder %s22, 0
      %p91 = por %p89, %p90
      %s92 = ssub.s32 %s16, %s23
      %p93 = scmp.eq.s32.totalorder %s92, 0
      %s95 = sadd.s32 %s94, 1
      %s96 = scalar_select %p93, %s94, %s95
      %p99 = pneg %p93
      %p100 = scmp.eq.s32.totalorder %s16, 1
      %p101 = por %p99, %p100
      %p102 = scmp.ne.s32.totalorder %s94, %s97
      %p103 = scmp.eq.s32.totalorder %s16, 0
      %p104 = por %p102, %p103
      %p105 = scmp.ne.s32.totalorder %s94, %s97
      %p106 = scmp.eq.s32.totalorder %s21, 1
      %p107 = por %p105, %p106
      %p108 = scmp.ne.s32.totalorder %s97, %s98
      %p109 = scmp.eq.s32.totalorder %s21, 0
      %p110 = por %p108, %p109
      %p111 = scmp.ne.s32.totalorder %s97, %s98
      %p112 = scmp.eq.s32.totalorder %s22, 1
      %p113 = por %p111, %p112
      %p115 = scmp.ne.s32.totalorder %s98, %s114
      %p116 = scmp.eq.s32.totalorder %s22, 0
      %p117 = por %p115, %p116
      %p118 = scmp.le.s32.totalorder 1, %s16
      %p119 = scmp.lt.s32.totalorder %s16, 3
      %p120 = pnand %p118, %p119
      %p121 = pneg %p120
      // Predicated region
      $region9: #{tpu_custom_call.1} parent=5 // pred_check
        _
      $region10: #{tpu_custom_call.1} parent=5 // pred_check_branch
        %123 = sbr.rel (%p120) target = $region12
      $region11: #{tpu_custom_call.1} parent=5 // pred_region
        %s124 = ssub.s32 %s16, 1
        // Predicated region
        $region13: #{tpu_custom_call.1} parent=11 // pred_check
          %p125 = pneg %p63
        $region14: #{tpu_custom_call.1} parent=11 // pred_check_branch
          %127 = sbr.rel (%p125) target = $region16
        $region15: #{tpu_custom_call.1} parent=11 // pred_region
          %s129 = ssub.s32 3072, 3072
          %130 = vsyncadd [#allocation6], %s129
          %s131 = sshll.u32 [#allocation5], 4
          %s132 = int_to_ptr.vmem [resolvable:$true] %s131
          %137 = dma.hbm_to_vmem [thread:$0]  %s1, 3072, %s132, [#allocation6], 64, 64, 4
        $region16: #{tpu_custom_call.1} parent=11 // pred_fallthru
          _
        // Predicated region
        $region17: #{tpu_custom_call.1} parent=11 // pred_check
          %p138 = pneg %p84
        $region18: #{tpu_custom_call.1} parent=11 // pred_check_branch
          %140 = sbr.rel (%p138) target = $region20
        $region19: #{tpu_custom_call.1} parent=11 // pred_region
          _
        $region20: #{tpu_custom_call.1} parent=11 // pred_fallthru
          _
      $region12: #{tpu_custom_call.1} parent=5 // pred_fallthru
        _
      %p141 = scmp.lt.s32.totalorder %s16, 2
      // Predicated region
      $region21: #{tpu_custom_call.1} parent=5 // pred_check
        %p142 = pneg %p141
      $region22: #{tpu_custom_call.1} parent=5 // pred_check_branch
        %144 = sbr.rel (%p142) target = $region24
      $region23: #{tpu_custom_call.1} parent=5 // pred_region
        // Predicated region
        $region25: #{tpu_custom_call.1} parent=23 // pred_check
          %p145 = pneg %p36
        $region26: #{tpu_custom_call.1} parent=23 // pred_check_branch
          %147 = sbr.rel (%p145) target = $region28
        $region27: #{tpu_custom_call.1} parent=23 // pred_region
          %s148 = sand.u32 %s26, 1
          %s149 = scalar_lea.sflag [#allocation3], %s148
          %s150 = sand.u32 %s26, 1
          %s151 = smul.addr %s150, 360
          %s152 = scalar_lea.vmem [#allocation2], %s151
          %s153 = smul.u32 30, %s16
          %s155 = ssub.s32 5760, 5760
          %156 = vsyncadd %s149, %s155
          %s157 = smul.addr %s153, 3
          %s158 = smul.addr %s157, 64
          %s159 = scalar_lea.hbm %s0, %s158
          %s160 = sshll.u32 %s152, 4
          %s161 = int_to_ptr.vmem [resolvable:$true] %s160
          %166 = dma.hbm_to_vmem [thread:$0]  %s159, 5760, %s161, %s149, 192, 192, 12
        $region28: #{tpu_custom_call.1} parent=23 // pred_fallthru
          _
      $region24: #{tpu_custom_call.1} parent=5 // pred_fallthru
        _
      %p167 = scmp.le.s32.totalorder 1, %s16
      %p168 = scmp.lt.s32.totalorder %s16, 3
      %p169 = pnand %p167, %p168
      %p170 = pneg %p169
      // Predicated region
      $region29: #{tpu_custom_call.1} parent=5 // pred_check
        _
      $region30: #{tpu_custom_call.1} parent=5 // pred_check_branch
        %172 = sbr.rel (%p169) target = $region32
      $region31: #{tpu_custom_call.1} parent=5 // pred_region
        %s173 = ssub.s32 %s16, 1
        %s174 = sand.u32 %s29, 1
        %s175 = scalar_lea.sflag [#allocation3], %s174
        %s176 = sand.u32 %s29, 1
        %s177 = smul.addr %s176, 360
        %s178 = scalar_lea.vmem [#allocation2], %s177
        // Predicated region
        $region33: #{tpu_custom_call.1} parent=31 // pred_check
          %p179 = pneg %p42
        $region34: #{tpu_custom_call.1} parent=31 // pred_check_branch
          %181 = sbr.rel (%p179) target = $region36
        $region35: #{tpu_custom_call.1} parent=31 // pred_region
          %182 = dma.done %s175, 5760
        $region36: #{tpu_custom_call.1} parent=31 // pred_fallthru
          _
        // Predicated region
        $region37: #{tpu_custom_call.1} parent=31 // pred_check
          %p183 = pneg %p63
        $region38: #{tpu_custom_call.1} parent=31 // pred_check_branch
          %185 = sbr.rel (%p183) target = $region40
        $region39: #{tpu_custom_call.1} parent=31 // pred_region
          %186 = dma.done [#allocation6], 3072
        $region40: #{tpu_custom_call.1} parent=31 // pred_fallthru
          _
        %s187 = sand.u32 %s29, 1
        %s188 = scalar_lea.sflag [#allocation3], %s187
        %s189 = sand.u32 %s29, 1
        %s190 = smul.addr %s189, 360
        %s191 = scalar_lea.vmem [#allocation2], %s190
        %p192 = pneg %p42
        %p193 = pneg %p39
        %p194 = pneg %p63
        %p195 = pneg %p60
        %p196 = pneg %p84
        %p197 = pneg %p81
        %p198 = pneg %p110
        %p199 = pneg %p107
        %s200 = sand.u32 %s97, 1
        %s201 = scalar_lea.sflag [#allocation4], %s200
        %s202 = sand.u32 %s97, 1
        %s203 = smul.addr %s202, 120
        %s204 = scalar_lea.vmem [#allocation7], %s203
        %s205 = smul.u32 30, %s21
        %s206 = smul.u32 30, %s21
        %v208 = vld [vmem:[%s178] sm:$0xff]
        %v209 = vld [vmem:[%s178 + $0x8] sm:$0xf]
        %v210 = vld [vmem:[%s178 + $0xc] sm:$0xff]
        %v211 = vld [vmem:[%s178 + $0x14] sm:$0xf]
        %v212 = vld [vmem:[%s178 + $0x18] sm:$0xff]
        %v213 = vld [vmem:[%s178 + $0x20] sm:$0xf]
        %v214 = vld [vmem:[%s178 + $0x24] sm:$0xff]
        %v215 = vld [vmem:[%s178 + $0x2c] sm:$0xf]
        %v216 = vld [vmem:[%s178 + $0x30] sm:$0xff]
        %v217 = vld [vmem:[%s178 + $0x38] sm:$0xf]
        %v218 = vld [vmem:[%s178 + $0x3c] sm:$0xff]
        %v219 = vld [vmem:[%s178 + $0x44] sm:$0xf]
        %v220 = vld [vmem:[%s178 + $0x48] sm:$0xff]
        %v221 = vld [vmem:[%s178 + $0x50] sm:$0xf]
        %v222 = vld [vmem:[%s178 + $0x54] sm:$0xff]
        %v223 = vld [vmem:[%s178 + $0x5c] sm:$0xf]
        %v224 = vld [vmem:[%s178 + $0x60] sm:$0xff]
        %v225 = vld [vmem:[%s178 + $0x68] sm:$0xf]
        %v226 = vld [vmem:[%s178 + $0x6c] sm:$0xff]
        %v227 = vld [vmem:[%s178 + $0x74] sm:$0xf]
        %v228 = vld [vmem:[%s178 + $0x78] sm:$0xff]
        %v229 = vld [vmem:[%s178 + $0x80] sm:$0xf]
        %v230 = vld [vmem:[%s178 + $0x84] sm:$0xff]
        %v231 = vld [vmem:[%s178 + $0x8c] sm:$0xf]
        %v232 = vld [vmem:[%s178 + $0x90] sm:$0xff]
        %v233 = vld [vmem:[%s178 + $0x98] sm:$0xf]
        %v234 = vld [vmem:[%s178 + $0x9c] sm:$0xff]
        %v235 = vld [vmem:[%s178 + $0xa4] sm:$0xf]
        %v236 = vld [vmem:[%s178 + $0xa8] sm:$0xff]
        %v237 = vld [vmem:[%s178 + $0xb0] sm:$0xf]
        %v238 = vld [vmem:[%s178 + $0xb4] sm:$0xff]
        %v239 = vld [vmem:[%s178 + $0xbc] sm:$0xf]
        %v240 = vld [vmem:[%s178 + $0xc0] sm:$0xff]
        %v241 = vld [vmem:[%s178 + $0xc8] sm:$0xf]
        %v242 = vld [vmem:[%s178 + $0xcc] sm:$0xff]
        %v243 = vld [vmem:[%s178 + $0xd4] sm:$0xf]
        %v244 = vld [vmem:[%s178 + $0xd8] sm:$0xff]
        %v245 = vld [vmem:[%s178 + $0xe0] sm:$0xf]
        %v246 = vld [vmem:[%s178 + $0xe4] sm:$0xff]
        %v247 = vld [vmem:[%s178 + $0xec] sm:$0xf]
        %v248 = vld [vmem:[%s178 + $0xf0] sm:$0xff]
        %v249 = vld [vmem:[%s178 + $0xf8] sm:$0xf]
        %v250 = vld [vmem:[%s178 + $0xfc] sm:$0xff]
        %v251 = vld [vmem:[%s178 + $0x104] sm:$0xf]
        %v252 = vld [vmem:[%s178 + $0x108] sm:$0xff]
        %v253 = vld [vmem:[%s178 + $0x110] sm:$0xf]
        %v254 = vld [vmem:[%s178 + $0x114] sm:$0xff]
        %v255 = vld [vmem:[%s178 + $0x11c] sm:$0xf]
        %v256 = vld [vmem:[%s178 + $0x120] sm:$0xff]
        %v257 = vld [vmem:[%s178 + $0x128] sm:$0xf]
        %v258 = vld [vmem:[%s178 + $0x12c] sm:$0xff]
        %v259 = vld [vmem:[%s178 + $0x134] sm:$0xf]
        %v260 = vld [vmem:[%s178 + $0x138] sm:$0xff]
        %v261 = vld [vmem:[%s178 + $0x140] sm:$0xf]
        %v262 = vld [vmem:[%s178 + $0x144] sm:$0xff]
        %v263 = vld [vmem:[%s178 + $0x14c] sm:$0xf]
        %v264 = vld [vmem:[%s178 + $0x150] sm:$0xff]
        %v265 = vld [vmem:[%s178 + $0x158] sm:$0xf]
        %v266 = vld [vmem:[%s178 + $0x15c] sm:$0xff]
        %v267 = vld [vmem:[%s178 + $0x164] sm:$0xf]
        %v268 = vld [vmem:[#allocation5] sm:$0xf]
        %v269 = vld [vmem:[#allocation5 + $0x4] sm:$0xf]
        %v270 = vld [vmem:[#allocation5 + $0x8] sm:$0xf]
        %v271 = vld [vmem:[#allocation5 + $0xc] sm:$0xf]
        %v272 = vld [vmem:[#allocation5 + $0x10] sm:$0xf]
        %v273 = vld [vmem:[#allocation5 + $0x14] sm:$0xf]
        %v274 = vld [vmem:[#allocation5 + $0x18] sm:$0xf]
        %v275 = vld [vmem:[#allocation5 + $0x1c] sm:$0xf]
        %v276 = vld [vmem:[#allocation5 + $0x20] sm:$0xf]
        %v277 = vld [vmem:[#allocation5 + $0x24] sm:$0xf]
        %v278 = vld [vmem:[#allocation5 + $0x28] sm:$0xf]
        %v279 = vld [vmem:[#allocation5 + $0x2c] sm:$0xf]
        %v280 = vld [vmem:[#allocation5 + $0x30] sm:$0xf]
        %v281 = vld [vmem:[#allocation5 + $0x34] sm:$0xf]
        %v282 = vld [vmem:[#allocation5 + $0x38] sm:$0xf]
        %v283 = vld [vmem:[#allocation5 + $0x3c] sm:$0xf]
        %v284 = vld [vmem:[#allocation5 + $0x40] sm:$0xf]
        %v285 = vld [vmem:[#allocation5 + $0x44] sm:$0xf]
        %v286 = vld [vmem:[#allocation5 + $0x48] sm:$0xf]
        %v287 = vld [vmem:[#allocation5 + $0x4c] sm:$0xf]
        %v288 = vld [vmem:[#allocation5 + $0x50] sm:$0xf]
        %v289 = vld [vmem:[#allocation5 + $0x54] sm:$0xf]
        %v290 = vld [vmem:[#allocation5 + $0x58] sm:$0xf]
        %v291 = vld [vmem:[#allocation5 + $0x5c] sm:$0xf]
        %v292 = vld [vmem:[#allocation5 + $0x60] sm:$0xf]
        %v293 = vld [vmem:[#allocation5 + $0x64] sm:$0xf]
        %v294 = vld [vmem:[#allocation5 + $0x68] sm:$0xf]
        %v295 = vld [vmem:[#allocation5 + $0x6c] sm:$0xf]
        %v296 = vld [vmem:[#allocation5 + $0x70] sm:$0xf]
        %v297 = vld [vmem:[#allocation5 + $0x74] sm:$0xf]
        %v298 = vld [vmem:[#allocation5 + $0x78] sm:$0xf]
        %v299 = vld [vmem:[#allocation5 + $0x7c] sm:$0xf]
        %v300 = vld [vmem:[#allocation5 + $0x80] sm:$0xf]
        %v301 = vld [vmem:[#allocation5 + $0x84] sm:$0xf]
        %v302 = vld [vmem:[#allocation5 + $0x88] sm:$0xf]
        %v303 = vld [vmem:[#allocation5 + $0x8c] sm:$0xf]
        %v304 = vld [vmem:[#allocation5 + $0x90] sm:$0xf]
        %v305 = vld [vmem:[#allocation5 + $0x94] sm:$0xf]
        %v306 = vld [vmem:[#allocation5 + $0x98] sm:$0xf]
        %v307 = vld [vmem:[#allocation5 + $0x9c] sm:$0xf]
        %v308 = vld [vmem:[#allocation5 + $0xa0] sm:$0xf]
        %v309 = vld [vmem:[#allocation5 + $0xa4] sm:$0xf]
        %v310 = vld [vmem:[#allocation5 + $0xa8] sm:$0xf]
        %v311 = vld [vmem:[#allocation5 + $0xac] sm:$0xf]
        %v312 = vld [vmem:[#allocation5 + $0xb0] sm:$0xf]
        %v313 = vld [vmem:[#allocation5 + $0xb4] sm:$0xf]
        %v314 = vld [vmem:[#allocation5 + $0xb8] sm:$0xf]
        %v315 = vld [vmem:[#allocation5 + $0xbc] sm:$0xf]
        %v316 = vld [vmem:[%s2] sm:$0x1]
        %v318 = vlaneseq
        %v319 = vshrl.u32 %v318, 7
        %v320 = vsub.s32 0, %v319
        %v321 = vrot.slane %v316, %v320
        %v383 = vunpack.c.l.b16 %v208
        %v384 = vunpack.c.h.b16 %v208
        %v385 = vunpack.c.l.b16 %v209
        %v386 = vunpack.c.l.b16 %v210
        %v387 = vunpack.c.h.b16 %v210
        %v388 = vunpack.c.l.b16 %v211
        %v389 = vunpack.c.l.b16 %v212
        %v390 = vunpack.c.h.b16 %v212
        %v391 = vunpack.c.l.b16 %v213
        %v392 = vunpack.c.l.b16 %v214
        %v393 = vunpack.c.h.b16 %v214
        %v394 = vunpack.c.l.b16 %v215
        %v395 = vunpack.c.l.b16 %v216
        %v396 = vunpack.c.h.b16 %v216
        %v397 = vunpack.c.l.b16 %v217
        %v398 = vunpack.c.l.b16 %v218
        %v399 = vunpack.c.h.b16 %v218
        %v400 = vunpack.c.l.b16 %v219
        %v401 = vunpack.c.l.b16 %v220
        %v402 = vunpack.c.h.b16 %v220
        %v403 = vunpack.c.l.b16 %v221
        %v404 = vunpack.c.l.b16 %v222
        %v405 = vunpack.c.h.b16 %v222
        %v406 = vunpack.c.l.b16 %v223
        %v407 = vunpack.c.l.b16 %v224
        %v408 = vunpack.c.h.b16 %v224
        %v409 = vunpack.c.l.b16 %v225
        %v410 = vunpack.c.l.b16 %v226
        %v411 = vunpack.c.h.b16 %v226
        %v412 = vunpack.c.l.b16 %v227
        %v413 = vunpack.c.l.b16 %v228
        %v414 = vunpack.c.h.b16 %v228
        %v415 = vunpack.c.l.b16 %v229
        %v416 = vunpack.c.l.b16 %v230
        %v417 = vunpack.c.h.b16 %v230
        %v418 = vunpack.c.l.b16 %v231
        %v419 = vunpack.c.l.b16 %v232
        %v420 = vunpack.c.h.b16 %v232
        %v421 = vunpack.c.l.b16 %v233
        %v422 = vunpack.c.l.b16 %v234
        %v423 = vunpack.c.h.b16 %v234
        %v424 = vunpack.c.l.b16 %v235
        %v425 = vunpack.c.l.b16 %v236
        %v426 = vunpack.c.h.b16 %v236
        %v427 = vunpack.c.l.b16 %v237
        %v428 = vunpack.c.l.b16 %v238
        %v429 = vunpack.c.h.b16 %v238
        %v430 = vunpack.c.l.b16 %v239
        %v431 = vunpack.c.l.b16 %v240
        %v432 = vunpack.c.h.b16 %v240
        %v433 = vunpack.c.l.b16 %v241
        %v434 = vunpack.c.l.b16 %v242
        %v435 = vunpack.c.h.b16 %v242
        %v436 = vunpack.c.l.b16 %v243
        %v437 = vunpack.c.l.b16 %v244
        %v438 = vunpack.c.h.b16 %v244
        %v439 = vunpack.c.l.b16 %v245
        %v440 = vunpack.c.l.b16 %v246
        %v441 = vunpack.c.h.b16 %v246
        %v442 = vunpack.c.l.b16 %v247
        %v443 = vunpack.c.l.b16 %v248
        %v444 = vunpack.c.h.b16 %v248
        %v445 = vunpack.c.l.b16 %v249
        %v446 = vunpack.c.l.b16 %v250
        %v447 = vunpack.c.h.b16 %v250
        %v448 = vunpack.c.l.b16 %v251
        %v449 = vunpack.c.l.b16 %v252
        %v450 = vunpack.c.h.b16 %v252
        %v451 = vunpack.c.l.b16 %v253
        %v452 = vunpack.c.l.b16 %v254
        %v453 = vunpack.c.h.b16 %v254
        %v454 = vunpack.c.l.b16 %v255
        %v455 = vunpack.c.l.b16 %v256
        %v456 = vunpack.c.h.b16 %v256
        %v457 = vunpack.c.l.b16 %v257
        %v458 = vunpack.c.l.b16 %v258
        %v459 = vunpack.c.h.b16 %v258
        %v460 = vunpack.c.l.b16 %v259
        %v461 = vunpack.c.l.b16 %v260
        %v462 = vunpack.c.h.b16 %v260
        %v463 = vunpack.c.l.b16 %v261
        %v464 = vunpack.c.l.b16 %v262
        %v465 = vunpack.c.h.b16 %v262
        %v466 = vunpack.c.l.b16 %v263
        %v467 = vunpack.c.l.b16 %v264
        %v468 = vunpack.c.h.b16 %v264
        %v469 = vunpack.c.l.b16 %v265
        %v470 = vunpack.c.l.b16 %v266
        %v471 = vunpack.c.h.b16 %v266
        %v472 = vunpack.c.l.b16 %v267
        %v473 = vpack.c.b16 %v386, %v383
        %v474 = vpack.c.b16 %v387, %v384
        %v475 = vpack.c.b16 %v388, %v385
        %v476 = vpack.c.b16 %v392, %v389
        %v477 = vpack.c.b16 %v393, %v390
        %v478 = vpack.c.b16 %v394, %v391
        %v479 = vpack.c.b16 %v398, %v395
        %v480 = vpack.c.b16 %v399, %v396
        %v481 = vpack.c.b16 %v400, %v397
        %v482 = vpack.c.b16 %v404, %v401
        %v483 = vpack.c.b16 %v405, %v402
        %v484 = vpack.c.b16 %v406, %v403
        %v485 = vpack.c.b16 %v410, %v407
        %v486 = vpack.c.b16 %v411, %v408
        %v487 = vpack.c.b16 %v412, %v409
        %v488 = vpack.c.b16 %v416, %v413
        %v489 = vpack.c.b16 %v417, %v414
        %v490 = vpack.c.b16 %v418, %v415
        %v491 = vpack.c.b16 %v422, %v419
        %v492 = vpack.c.b16 %v423, %v420
        %v493 = vpack.c.b16 %v424, %v421
        %v494 = vpack.c.b16 %v428, %v425
        %v495 = vpack.c.b16 %v429, %v426
        %v496 = vpack.c.b16 %v430, %v427
        %v497 = vpack.c.b16 %v434, %v431
        %v498 = vpack.c.b16 %v435, %v432
        %v499 = vpack.c.b16 %v436, %v433
        %v500 = vpack.c.b16 %v440, %v437
        %v501 = vpack.c.b16 %v441, %v438
        %v502 = vpack.c.b16 %v442, %v439
        %v503 = vpack.c.b16 %v446, %v443
        %v504 = vpack.c.b16 %v447, %v444
        %v505 = vpack.c.b16 %v448, %v445
        %v506 = vpack.c.b16 %v452, %v449
        %v507 = vpack.c.b16 %v453, %v450
        %v508 = vpack.c.b16 %v454, %v451
        %v509 = vpack.c.b16 %v458, %v455
        %v510 = vpack.c.b16 %v459, %v456
        %v511 = vpack.c.b16 %v460, %v457
        %v512 = vpack.c.b16 %v464, %v461
        %v513 = vpack.c.b16 %v465, %v462
        %v514 = vpack.c.b16 %v466, %v463
        %v515 = vpack.c.b16 %v470, %v467
        %v516 = vpack.c.b16 %v471, %v468
        %v517 = vpack.c.b16 %v472, %v469
        %v611 = vunpack.c.l.b16 %v268
        %v612 = vunpack.c.l.b16 %v269
        %v613 = vunpack.c.l.b16 %v270
        %v614 = vunpack.c.l.b16 %v271
        %v615 = vunpack.c.l.b16 %v272
        %v616 = vunpack.c.l.b16 %v273
        %v617 = vunpack.c.l.b16 %v274
        %v618 = vunpack.c.l.b16 %v275
        %v619 = vunpack.c.l.b16 %v276
        %v620 = vunpack.c.l.b16 %v277
        %v621 = vunpack.c.l.b16 %v278
        %v622 = vunpack.c.l.b16 %v279
        %v623 = vunpack.c.l.b16 %v280
        %v624 = vunpack.c.l.b16 %v281
        %v625 = vunpack.c.l.b16 %v282
        %v626 = vunpack.c.l.b16 %v283
        %v627 = vunpack.c.l.b16 %v284
        %v628 = vunpack.c.l.b16 %v285
        %v629 = vunpack.c.l.b16 %v286
        %v630 = vunpack.c.l.b16 %v287
        %v631 = vunpack.c.l.b16 %v288
        %v632 = vunpack.c.l.b16 %v289
        %v633 = vunpack.c.l.b16 %v290
        %v634 = vunpack.c.l.b16 %v291
        %v635 = vunpack.c.l.b16 %v292
        %v636 = vunpack.c.l.b16 %v293
        %v637 = vunpack.c.l.b16 %v294
        %v638 = vunpack.c.l.b16 %v295
        %v639 = vunpack.c.l.b16 %v296
        %v640 = vunpack.c.l.b16 %v297
        %v641 = vunpack.c.l.b16 %v298
        %v642 = vunpack.c.l.b16 %v299
        %v643 = vunpack.c.l.b16 %v300
        %v644 = vunpack.c.l.b16 %v301
        %v645 = vunpack.c.l.b16 %v302
        %v646 = vunpack.c.l.b16 %v303
        %v647 = vunpack.c.l.b16 %v304
        %v648 = vunpack.c.l.b16 %v305
        %v649 = vunpack.c.l.b16 %v306
        %v650 = vunpack.c.l.b16 %v307
        %v651 = vunpack.c.l.b16 %v308
        %v652 = vunpack.c.l.b16 %v309
        %v653 = vunpack.c.l.b16 %v310
        %v654 = vunpack.c.l.b16 %v311
        %v655 = vunpack.c.l.b16 %v312
        %v656 = vunpack.c.l.b16 %v313
        %v657 = vunpack.c.l.b16 %v314
        %v658 = vunpack.c.l.b16 %v315
        %v659 = vpack.c.b16 %v612, %v611
        %v660 = vpack.c.b16 %v614, %v613
        %v661 = vpack.c.b16 %v616, %v615
        %v662 = vpack.c.b16 %v618, %v617
        %v663 = vpack.c.b16 %v620, %v619
        %v664 = vpack.c.b16 %v622, %v621
        %v665 = vpack.c.b16 %v624, %v623
        %v666 = vpack.c.b16 %v626, %v625
        %v667 = vpack.c.b16 %v628, %v627
        %v668 = vpack.c.b16 %v630, %v629
        %v669 = vpack.c.b16 %v632, %v631
        %v670 = vpack.c.b16 %v634, %v633
        %v671 = vpack.c.b16 %v636, %v635
        %v672 = vpack.c.b16 %v638, %v637
        %v673 = vpack.c.b16 %v640, %v639
        %v674 = vpack.c.b16 %v642, %v641
        %v675 = vpack.c.b16 %v644, %v643
        %v676 = vpack.c.b16 %v646, %v645
        %v677 = vpack.c.b16 %v648, %v647
        %v678 = vpack.c.b16 %v650, %v649
        %v679 = vpack.c.b16 %v652, %v651
        %v680 = vpack.c.b16 %v654, %v653
        %v681 = vpack.c.b16 %v656, %v655
        %v682 = vpack.c.b16 %v658, %v657
        %707 = vmatprep.subr.bf16.mxu0 0
        %708 = vmatpush1.bf16.msra.mxu0 %v659
        %709 = vmatprep.subr.bf16.mxu0 0
        %710 = vmatpush1.bf16.msra.mxu0 %v660
        %711 = vmatprep.subr.bf16.mxu0 0
        %712 = vmatpush1.bf16.msra.mxu0 %v661
        %713 = vmatprep.subr.bf16.mxu0 0
        %714 = vmatpush1.bf16.msra.mxu0 %v662
        %715 = vmatprep.subr.bf16.mxu0 0
        %716 = vmatpush1.bf16.msra.mxu0 %v663
        %717 = vmatprep.subr.bf16.mxu0 0
        %718 = vmatpush1.bf16.msra.mxu0 %v664
        %719 = vmatprep.subr.bf16.mxu0 0
        %720 = vmatpush1.bf16.msra.mxu0 %v665
        %721 = vmatprep.subr.bf16.mxu0 0
        %722 = vmatpush1.bf16.msra.mxu0 %v666
        %723 = vmatprep.subr.bf16.mxu0 0
        %724 = vmatpush1.bf16.msra.mxu0 %v667
        %725 = vmatprep.subr.bf16.mxu0 0
        %726 = vmatpush1.bf16.msra.mxu0 %v668
        %727 = vmatprep.subr.bf16.mxu0 0
        %728 = vmatpush1.bf16.msra.mxu0 %v669
        %729 = vmatprep.subr.bf16.mxu0 0
        %730 = vmatpush1.bf16.msra.mxu0 %v670
        %731 = vmatprep.subr.bf16.mxu0 0
        %732 = vmatpush1.bf16.msra.mxu0 %v671
        %733 = vmatprep.subr.bf16.mxu0 0
        %734 = vmatpush1.bf16.msra.mxu0 %v672
        %735 = vmatprep.subr.bf16.mxu0 0
        %736 = vmatpush1.bf16.msra.mxu0 %v673
        %737 = vmatprep.subr.bf16.mxu0 0
        %738 = vmatpush1.bf16.msra.mxu0 %v674
        %739 = vmatprep.mubr.bf16.mxu0 %v474
        %740 = vmatmul.mubr.bf16.gmra.mrb[0].mxu0 %v473
        %v741 = vpop.f32.mrb[0].mxu0
        %v742 = vadd.f32 %v321, %v741
        %v743 = vpop.f32.mrb[0].mxu0
        %v744 = vpop.f32.mrb[0].mxu0
        %v745 = vadd.f32 %v321, %v744
        %v746 = vpop.f32.mrb[0].mxu0
        %747 = vmatprep.mubr.bf16.mxu0 %v477
        %748 = vmatmul.mubr.bf16.gmra.mrb[0].mxu0 %v476
        %v749 = vpop.f32.mrb[0].mxu0
        %v750 = vadd.f32 %v321, %v749
        %v751 = vpop.f32.mrb[0].mxu0
        %v752 = vpop.f32.mrb[0].mxu0
        %v753 = vadd.f32 %v321, %v752
        %v754 = vpop.f32.mrb[0].mxu0
        %755 = vmatprep.mubr.bf16.mxu0 %v480
        %756 = vmatmul.mubr.bf16.gmra.mrb[0].mxu0 %v479
        %v757 = vpop.f32.mrb[0].mxu0
        %v758 = vadd.f32 %v321, %v757
        %v759 = vpop.f32.mrb[0].mxu0
        %v760 = vpop.f32.mrb[0].mxu0
        %v761 = vadd.f32 %v321, %v760
        %v762 = vpop.f32.mrb[0].mxu0
        %763 = vmatprep.mubr.bf16.mxu0 %v483
        %764 = vmatmul.mubr.bf16.gmra.mrb[0].mxu0 %v482
        %v765 = vpop.f32.mrb[0].mxu0
        %v766 = vadd.f32 %v321, %v765
        %v767 = vpop.f32.mrb[0].mxu0
        %v768 = vpop.f32.mrb[0].mxu0
        %v769 = vadd.f32 %v321, %v768
        %v770 = vpop.f32.mrb[0].mxu0
        %771 = vmatprep.mubr.bf16.mxu0 %v486
        %772 = vmatmul.mubr.bf16.gmra.mrb[0].mxu0 %v485
        %v773 = vpop.f32.mrb[0].mxu0
        %v774 = vadd.f32 %v321, %v773
        %v775 = vpop.f32.mrb[0].mxu0
        %v776 = vpop.f32.mrb[0].mxu0
        %v777 = vadd.f32 %v321, %v776
        %v778 = vpop.f32.mrb[0].mxu0
        %779 = vmatprep.mubr.bf16.mxu0 %v489
        %780 = vmatmul.mubr.bf16.gmra.mrb[0].mxu0 %v488
        %v781 = vpop.f32.mrb[0].mxu0
        %v782 = vadd.f32 %v321, %v781
        %v783 = vpop.f32.mrb[0].mxu0
        %v784 = vpop.f32.mrb[0].mxu0
        %v785 = vadd.f32 %v321, %v784
        %v786 = vpop.f32.mrb[0].mxu0
        %787 = vmatprep.mubr.bf16.mxu0 %v492
        %788 = vmatmul.mubr.bf16.gmra.mrb[0].mxu0 %v491
        %v789 = vpop.f32.mrb[0].mxu0
        %v790 = vadd.f32 %v321, %v789
        %v791 = vpop.f32.mrb[0].mxu0
        %v792 = vpop.f32.mrb[0].mxu0
        %v793 = vadd.f32 %v321, %v792
        %v794 = vpop.f32.mrb[0].mxu0
        %795 = vmatprep.mubr.bf16.mxu0 %v495
        %796 = vmatmul.mubr.bf16.gmra.mrb[0].mxu0 %v494
        %v797 = vpop.f32.mrb[0].mxu0
        %v798 = vadd.f32 %v321, %v797
        %v799 = vpop.f32.mrb[0].mxu0
        %v800 = vpop.f32.mrb[0].mxu0
        %v801 = vadd.f32 %v321, %v800
        %v802 = vpop.f32.mrb[0].mxu0
        %803 = vmatprep.mubr.bf16.mxu0 %v498
        %804 = vmatmul.mubr.bf16.gmra.mrb[0].mxu0 %v497
        %v805 = vpop.f32.mrb[0].mxu0
        %v806 = vadd.f32 %v321, %v805
        %v807 = vpop.f32.mrb[0].mxu0
        %v808 = vpop.f32.mrb[0].mxu0
        %v809 = vadd.f32 %v321, %v808
        %v810 = vpop.f32.mrb[0].mxu0
        %811 = vmatprep.mubr.bf16.mxu0 %v501
        %812 = vmatmul.mubr.bf16.gmra.mrb[0].mxu0 %v500
        %v813 = vpop.f32.mrb[0].mxu0
        %v814 = vadd.f32 %v321, %v813
        %v815 = vpop.f32.mrb[0].mxu0
        %v816 = vpop.f32.mrb[0].mxu0
        %v817 = vadd.f32 %v321, %v816
        %v818 = vpop.f32.mrb[0].mxu0
        %819 = vmatprep.mubr.bf16.mxu0 %v504
        %820 = vmatmul.mubr.bf16.gmra.mrb[0].mxu0 %v503
        %v821 = vpop.f32.mrb[0].mxu0
        %v822 = vadd.f32 %v321, %v821
        %v823 = vpop.f32.mrb[0].mxu0
        %v824 = vpop.f32.mrb[0].mxu0
        %v825 = vadd.f32 %v321, %v824
        %v826 = vpop.f32.mrb[0].mxu0
        %827 = vmatprep.mubr.bf16.mxu0 %v507
        %828 = vmatmul.mubr.bf16.gmra.mrb[0].mxu0 %v506
        %v829 = vpop.f32.mrb[0].mxu0
        %v830 = vadd.f32 %v321, %v829
        %v831 = vpop.f32.mrb[0].mxu0
        %v832 = vpop.f32.mrb[0].mxu0
        %v833 = vadd.f32 %v321, %v832
        %v834 = vpop.f32.mrb[0].mxu0
        %835 = vmatprep.mubr.bf16.mxu0 %v510
        %836 = vmatmul.mubr.bf16.gmra.mrb[0].mxu0 %v509
        %v837 = vpop.f32.mrb[0].mxu0
        %v838 = vadd.f32 %v321, %v837
        %v839 = vpop.f32.mrb[0].mxu0
        %v840 = vpop.f32.mrb[0].mxu0
        %v841 = vadd.f32 %v321, %v840
        %v842 = vpop.f32.mrb[0].mxu0
        %843 = vmatprep.mubr.bf16.mxu0 %v513
        %844 = vmatmul.mubr.bf16.gmra.mrb[0].mxu0 %v512
        %v845 = vpop.f32.mrb[0].mxu0
        %v846 = vadd.f32 %v321, %v845
        %v847 = vpop.f32.mrb[0].mxu0
        %v848 = vpop.f32.mrb[0].mxu0
        %v849 = vadd.f32 %v321, %v848
        %v850 = vpop.f32.mrb[0].mxu0
        %851 = vmatprep.mubr.bf16.mxu0 %v516
        %852 = vmatmul.mubr.bf16.gmra.mrb[0].mxu0 %v515
        %v853 = vpop.f32.mrb[0].mxu0
        %v854 = vadd.f32 %v321, %v853
        %v855 = vpop.f32.mrb[0].mxu0
        %v856 = vpop.f32.mrb[0].mxu0
        %v857 = vadd.f32 %v321, %v856
        %v858 = vpop.f32.mrb[0].mxu0
        %859 = vdwg.mxu0
        %860 = vmatprep.subr.bf16.mxu0 0
        %861 = vmatpush1.bf16.msra.mxu0 %v675
        %862 = vmatprep.subr.bf16.mxu0 0
        %863 = vmatpush1.bf16.msra.mxu0 %v676
        %864 = vmatprep.subr.bf16.mxu0 0
        %865 = vmatpush1.bf16.msra.mxu0 %v677
        %866 = vmatprep.subr.bf16.mxu0 0
        %867 = vmatpush1.bf16.msra.mxu0 %v678
        %868 = vmatprep.subr.bf16.mxu0 0
        %869 = vmatpush1.bf16.msra.mxu0 %v679
        %870 = vmatprep.subr.bf16.mxu0 0
        %871 = vmatpush1.bf16.msra.mxu0 %v680
        %872 = vmatprep.subr.bf16.mxu0 0
        %873 = vmatpush1.bf16.msra.mxu0 %v681
        %874 = vmatprep.subr.bf16.mxu0 0
        %875 = vmatpush1.bf16.msra.mxu0 %v682
        %876 = vmatprep.subr.bf16.mxu0 0
        %877 = vmatpush1.bf16.msra.mxu0 0
        %878 = vmatprep.subr.bf16.mxu0 0
        %879 = vmatpush1.bf16.msra.mxu0 0
        %880 = vmatprep.subr.bf16.mxu0 0
        %881 = vmatpush1.bf16.msra.mxu0 0
        %882 = vmatprep.subr.bf16.mxu0 0
        %883 = vmatpush1.bf16.msra.mxu0 0
        %884 = vmatprep.subr.bf16.mxu0 0
        %885 = vmatpush1.bf16.msra.mxu0 0
        %886 = vmatprep.subr.bf16.mxu0 0
        %887 = vmatpush1.bf16.msra.mxu0 0
        %888 = vmatprep.subr.bf16.mxu0 0
        %889 = vmatpush1.bf16.msra.mxu0 0
        %890 = vmatprep.subr.bf16.mxu0 0
        %891 = vmatpush1.bf16.msra.mxu0 0
        %892 = vmatprep.mubr.bf16.mxu0 0
        %893 = vmatmul.mubr.bf16.gmra.mrb[0].mxu0 %v475
        %v894 = vpop.f32.mrb[0].mxu0
        %v895 = vadd.f32 %v742, %v894
        %v896 = vpop.f32.mrb[0].mxu0
        %v897 = vpop.f32.mrb[0].mxu0
        %v898 = vadd.f32 %v745, %v897
        %v899 = vpop.f32.mrb[0].mxu0
        %900 = vmatprep.mubr.bf16.mxu0 0
        %901 = vmatmul.mubr.bf16.gmra.mrb[0].mxu0 %v478
        %v902 = vpop.f32.mrb[0].mxu0
        %v903 = vadd.f32 %v750, %v902
        %v904 = vpop.f32.mrb[0].mxu0
        %v905 = vpop.f32.mrb[0].mxu0
        %v906 = vadd.f32 %v753, %v905
        %v907 = vpop.f32.mrb[0].mxu0
        %908 = vmatprep.mubr.bf16.mxu0 0
        %909 = vmatmul.mubr.bf16.gmra.mrb[0].mxu0 %v481
        %v910 = vpop.f32.mrb[0].mxu0
        %v911 = vadd.f32 %v758, %v910
        %v912 = vpop.f32.mrb[0].mxu0
        %v913 = vpop.f32.mrb[0].mxu0
        %v914 = vadd.f32 %v761, %v913
        %v915 = vpop.f32.mrb[0].mxu0
        %916 = vmatprep.mubr.bf16.mxu0 0
        %917 = vmatmul.mubr.bf16.gmra.mrb[0].mxu0 %v484
        %v918 = vpop.f32.mrb[0].mxu0
        %v919 = vadd.f32 %v766, %v918
        %v920 = vpop.f32.mrb[0].mxu0
        %v921 = vpop.f32.mrb[0].mxu0
        %v922 = vadd.f32 %v769, %v921
        %v923 = vpop.f32.mrb[0].mxu0
        %924 = vmatprep.mubr.bf16.mxu0 0
        %925 = vmatmul.mubr.bf16.gmra.mrb[0].mxu0 %v487
        %v926 = vpop.f32.mrb[0].mxu0
        %v927 = vadd.f32 %v774, %v926
        %v928 = vpop.f32.mrb[0].mxu0
        %v929 = vpop.f32.mrb[0].mxu0
        %v930 = vadd.f32 %v777, %v929
        %v931 = vpop.f32.mrb[0].mxu0
        %932 = vmatprep.mubr.bf16.mxu0 0
        %933 = vmatmul.mubr.bf16.gmra.mrb[0].mxu0 %v490
        %v934 = vpop.f32.mrb[0].mxu0
        %v935 = vadd.f32 %v782, %v934
        %v936 = vpop.f32.mrb[0].mxu0
        %v937 = vpop.f32.mrb[0].mxu0
        %v938 = vadd.f32 %v785, %v937
        %v939 = vpop.f32.mrb[0].mxu0
        %940 = vmatprep.mubr.bf16.mxu0 0
        %941 = vmatmul.mubr.bf16.gmra.mrb[0].mxu0 %v493
        %v942 = vpop.f32.mrb[0].mxu0
        %v943 = vadd.f32 %v790, %v942
        %v944 = vpop.f32.mrb[0].mxu0
        %v945 = vpop.f32.mrb[0].mxu0
        %v946 = vadd.f32 %v793, %v945
        %v947 = vpop.f32.mrb[0].mxu0
        %948 = vmatprep.mubr.bf16.mxu0 0
        %949 = vmatmul.mubr.bf16.gmra.mrb[0].mxu0 %v496
        %v950 = vpop.f32.mrb[0].mxu0
        %v951 = vadd.f32 %v798, %v950
        %v952 = vpop.f32.mrb[0].mxu0
        %v953 = vpop.f32.mrb[0].mxu0
        %v954 = vadd.f32 %v801, %v953
        %v955 = vpop.f32.mrb[0].mxu0
        %956 = vmatprep.mubr.bf16.mxu0 0
        %957 = vmatmul.mubr.bf16.gmra.mrb[0].mxu0 %v499
        %v958 = vpop.f32.mrb[0].mxu0
        %v959 = vadd.f32 %v806, %v958
        %v960 = vpop.f32.mrb[0].mxu0
        %v961 = vpop.f32.mrb[0].mxu0
        %v962 = vadd.f32 %v809, %v961
        %v963 = vpop.f32.mrb[0].mxu0
        %964 = vmatprep.mubr.bf16.mxu0 0
        %965 = vmatmul.mubr.bf16.gmra.mrb[0].mxu0 %v502
        %v966 = vpop.f32.mrb[0].mxu0
        %v967 = vadd.f32 %v814, %v966
        %v968 = vpop.f32.mrb[0].mxu0
        %v969 = vpop.f32.mrb[0].mxu0
        %v970 = vadd.f32 %v817, %v969
        %v971 = vpop.f32.mrb[0].mxu0
        %972 = vmatprep.mubr.bf16.mxu0 0
        %973 = vmatmul.mubr.bf16.gmra.mrb[0].mxu0 %v505
        %v974 = vpop.f32.mrb[0].mxu0
        %v975 = vadd.f32 %v822, %v974
        %v976 = vpop.f32.mrb[0].mxu0
        %v977 = vpop.f32.mrb[0].mxu0
        %v978 = vadd.f32 %v825, %v977
        %v979 = vpop.f32.mrb[0].mxu0
        %980 = vmatprep.mubr.bf16.mxu0 0
        %981 = vmatmul.mubr.bf16.gmra.mrb[0].mxu0 %v508
        %v982 = vpop.f32.mrb[0].mxu0
        %v983 = vadd.f32 %v830, %v982
        %v984 = vpop.f32.mrb[0].mxu0
        %v985 = vpop.f32.mrb[0].mxu0
        %v986 = vadd.f32 %v833, %v985
        %v987 = vpop.f32.mrb[0].mxu0
        %988 = vmatprep.mubr.bf16.mxu0 0
        %989 = vmatmul.mubr.bf16.gmra.mrb[0].mxu0 %v511
        %v990 = vpop.f32.mrb[0].mxu0
        %v991 = vadd.f32 %v838, %v990
        %v992 = vpop.f32.mrb[0].mxu0
        %v993 = vpop.f32.mrb[0].mxu0
        %v994 = vadd.f32 %v841, %v993
        %v995 = vpop.f32.mrb[0].mxu0
        %996 = vmatprep.mubr.bf16.mxu0 0
        %997 = vmatmul.mubr.bf16.gmra.mrb[0].mxu0 %v514
        %v998 = vpop.f32.mrb[0].mxu0
        %v999 = vadd.f32 %v846, %v998
        %v1000 = vpop.f32.mrb[0].mxu0
        %v1001 = vpop.f32.mrb[0].mxu0
        %v1002 = vadd.f32 %v849, %v1001
        %v1003 = vpop.f32.mrb[0].mxu0
        %1004 = vmatprep.mubr.bf16.mxu0 0
        %1005 = vmatmul.mubr.bf16.gmra.mrb[0].mxu0 %v517
        %v1006 = vpop.f32.mrb[0].mxu0
        %v1007 = vadd.f32 %v854, %v1006
        %v1008 = vpop.f32.mrb[0].mxu0
        %v1009 = vpop.f32.mrb[0].mxu0
        %v1010 = vadd.f32 %v857, %v1009
        %v1011 = vpop.f32.mrb[0].mxu0
        %1012 = vdwg.mxu0
        %v1013 = vmax.f32 %v895, 0.0
        %v1014 = vmax.f32 %v898, 0.0
        %v1015 = vmax.f32 %v903, 0.0
        %v1016 = vmax.f32 %v906, 0.0
        %v1017 = vmax.f32 %v911, 0.0
        %v1018 = vmax.f32 %v914, 0.0
        %v1019 = vmax.f32 %v919, 0.0
        %v1020 = vmax.f32 %v922, 0.0
        %v1021 = vmax.f32 %v927, 0.0
        %v1022 = vmax.f32 %v930, 0.0
        %v1023 = vmax.f32 %v935, 0.0
        %v1024 = vmax.f32 %v938, 0.0
        %v1025 = vmax.f32 %v943, 0.0
        %v1026 = vmax.f32 %v946, 0.0
        %v1027 = vmax.f32 %v951, 0.0
        %v1028 = vmax.f32 %v954, 0.0
        %v1029 = vmax.f32 %v959, 0.0
        %v1030 = vmax.f32 %v962, 0.0
        %v1031 = vmax.f32 %v967, 0.0
        %v1032 = vmax.f32 %v970, 0.0
        %v1033 = vmax.f32 %v975, 0.0
        %v1034 = vmax.f32 %v978, 0.0
        %v1035 = vmax.f32 %v983, 0.0
        %v1036 = vmax.f32 %v986, 0.0
        %v1037 = vmax.f32 %v991, 0.0
        %v1038 = vmax.f32 %v994, 0.0
        %v1039 = vmax.f32 %v999, 0.0
        %v1040 = vmax.f32 %v1002, 0.0
        %v1041 = vmax.f32 %v1007, 0.0
        %v1042 = vmax.f32 %v1010, 0.0
        %v1043 = vpack.c.bf16 %v1014, %v1013
        %v1044 = vpack.c.bf16 %v1016, %v1015
        %v1045 = vpack.c.bf16 %v1018, %v1017
        %v1046 = vpack.c.bf16 %v1020, %v1019
        %v1047 = vpack.c.bf16 %v1022, %v1021
        %v1048 = vpack.c.bf16 %v1024, %v1023
        %v1049 = vpack.c.bf16 %v1026, %v1025
        %v1050 = vpack.c.bf16 %v1028, %v1027
        %v1051 = vpack.c.bf16 %v1030, %v1029
        %v1052 = vpack.c.bf16 %v1032, %v1031
        %v1053 = vpack.c.bf16 %v1034, %v1033
        %v1054 = vpack.c.bf16 %v1036, %v1035
        %v1055 = vpack.c.bf16 %v1038, %v1037
        %v1056 = vpack.c.bf16 %v1040, %v1039
        %v1057 = vpack.c.bf16 %v1042, %v1041
        %v1073 = vunpack.c.l.b16 %v1043
        %v1074 = vunpack.c.h.b16 %v1043
        %v1075 = vunpack.c.l.b16 %v1044
        %v1076 = vunpack.c.h.b16 %v1044
        %v1077 = vunpack.c.l.b16 %v1045
        %v1078 = vunpack.c.h.b16 %v1045
        %v1079 = vunpack.c.l.b16 %v1046
        %v1080 = vunpack.c.h.b16 %v1046
        %v1081 = vunpack.c.l.b16 %v1047
        %v1082 = vunpack.c.h.b16 %v1047
        %v1083 = vunpack.c.l.b16 %v1048
        %v1084 = vunpack.c.h.b16 %v1048
        %v1085 = vunpack.c.l.b16 %v1049
        %v1086 = vunpack.c.h.b16 %v1049
        %v1087 = vunpack.c.l.b16 %v1050
        %v1088 = vunpack.c.h.b16 %v1050
        %v1089 = vunpack.c.l.b16 %v1051
        %v1090 = vunpack.c.h.b16 %v1051
        %v1091 = vunpack.c.l.b16 %v1052
        %v1092 = vunpack.c.h.b16 %v1052
        %v1093 = vunpack.c.l.b16 %v1053
        %v1094 = vunpack.c.h.b16 %v1053
        %v1095 = vunpack.c.l.b16 %v1054
        %v1096 = vunpack.c.h.b16 %v1054
        %v1097 = vunpack.c.l.b16 %v1055
        %v1098 = vunpack.c.h.b16 %v1055
        %v1099 = vunpack.c.l.b16 %v1056
        %v1100 = vunpack.c.h.b16 %v1056
        %v1101 = vunpack.c.l.b16 %v1057
        %v1102 = vunpack.c.h.b16 %v1057
        %v1103 = vpack.c.b16 %v1073, %v1073
        %v1104 = vpack.c.b16 %v1074, %v1074
        %v1105 = vpack.c.b16 %v1075, %v1075
        %v1106 = vpack.c.b16 %v1076, %v1076
        %v1107 = vpack.c.b16 %v1077, %v1077
        %v1108 = vpack.c.b16 %v1078, %v1078
        %v1109 = vpack.c.b16 %v1079, %v1079
        %v1110 = vpack.c.b16 %v1080, %v1080
        %v1111 = vpack.c.b16 %v1081, %v1081
        %v1112 = vpack.c.b16 %v1082, %v1082
        %v1113 = vpack.c.b16 %v1083, %v1083
        %v1114 = vpack.c.b16 %v1084, %v1084
        %v1115 = vpack.c.b16 %v1085, %v1085
        %v1116 = vpack.c.b16 %v1086, %v1086
        %v1117 = vpack.c.b16 %v1087, %v1087
        %v1118 = vpack.c.b16 %v1088, %v1088
        %v1119 = vpack.c.b16 %v1089, %v1089
        %v1120 = vpack.c.b16 %v1090, %v1090
        %v1121 = vpack.c.b16 %v1091, %v1091
        %v1122 = vpack.c.b16 %v1092, %v1092
        %v1123 = vpack.c.b16 %v1093, %v1093
        %v1124 = vpack.c.b16 %v1094, %v1094
        %v1125 = vpack.c.b16 %v1095, %v1095
        %v1126 = vpack.c.b16 %v1096, %v1096
        %v1127 = vpack.c.b16 %v1097, %v1097
        %v1128 = vpack.c.b16 %v1098, %v1098
        %v1129 = vpack.c.b16 %v1099, %v1099
        %v1130 = vpack.c.b16 %v1100, %v1100
        %v1131 = vpack.c.b16 %v1101, %v1101
        %v1132 = vpack.c.b16 %v1102, %v1102
        %1163 = vst [vmem:[%s204] sm:$0xf] %v1103
        %1164 = vst [vmem:[%s204 + $0x4] sm:$0xf] %v1104
        %1165 = vst [vmem:[%s204 + $0x8] sm:$0xf] %v1105
        %1166 = vst [vmem:[%s204 + $0xc] sm:$0xf] %v1106
        %1167 = vst [vmem:[%s204 + $0x10] sm:$0xf] %v1107
        %1168 = vst [vmem:[%s204 + $0x14] sm:$0xf] %v1108
        %1169 = vst [vmem:[%s204 + $0x18] sm:$0xf] %v1109
        %1170 = vst [vmem:[%s204 + $0x1c] sm:$0xf] %v1110
        %1171 = vst [vmem:[%s204 + $0x20] sm:$0xf] %v1111
        %1172 = vst [vmem:[%s204 + $0x24] sm:$0xf] %v1112
        %1173 = vst [vmem:[%s204 + $0x28] sm:$0xf] %v1113
        %1174 = vst [vmem:[%s204 + $0x2c] sm:$0xf] %v1114
        %1175 = vst [vmem:[%s204 + $0x30] sm:$0xf] %v1115
        %1176 = vst [vmem:[%s204 + $0x34] sm:$0xf] %v1116
        %1177 = vst [vmem:[%s204 + $0x38] sm:$0xf] %v1117
        %1178 = vst [vmem:[%s204 + $0x3c] sm:$0xf] %v1118
        %1179 = vst [vmem:[%s204 + $0x40] sm:$0xf] %v1119
        %1180 = vst [vmem:[%s204 + $0x44] sm:$0xf] %v1120
        %1181 = vst [vmem:[%s204 + $0x48] sm:$0xf] %v1121
        %1182 = vst [vmem:[%s204 + $0x4c] sm:$0xf] %v1122
        %1183 = vst [vmem:[%s204 + $0x50] sm:$0xf] %v1123
        %1184 = vst [vmem:[%s204 + $0x54] sm:$0xf] %v1124
        %1185 = vst [vmem:[%s204 + $0x58] sm:$0xf] %v1125
        %1186 = vst [vmem:[%s204 + $0x5c] sm:$0xf] %v1126
        %1187 = vst [vmem:[%s204 + $0x60] sm:$0xf] %v1127
        %1188 = vst [vmem:[%s204 + $0x64] sm:$0xf] %v1128
        %1189 = vst [vmem:[%s204 + $0x68] sm:$0xf] %v1129
        %1190 = vst [vmem:[%s204 + $0x6c] sm:$0xf] %v1130
        %1191 = vst [vmem:[%s204 + $0x70] sm:$0xf] %v1131
        %1192 = vst [vmem:[%s204 + $0x74] sm:$0xf] %v1132
        %s1193 = sand.u32 %s97, 1
        %s1194 = scalar_lea.sflag [#allocation4], %s1193
        %s1195 = sand.u32 %s97, 1
        %s1196 = smul.addr %s1195, 120
        %s1197 = scalar_lea.vmem [#allocation7], %s1196
        // Predicated region
        $region41: #{tpu_custom_call.1} parent=31 // pred_check
          %p1198 = pneg %p107
        $region42: #{tpu_custom_call.1} parent=31 // pred_check_branch
          %1200 = sbr.rel (%p1198) target = $region44
        $region43: #{tpu_custom_call.1} parent=31 // pred_region
          %s1201 = smul.u32 30, %s21
          %s1203 = ssub.s32 1920, 1920
          %1204 = vsyncadd %s1194, %s1203
          %s1205 = smul.addr %s1201, 64
          %s1206 = scalar_lea.hbm %s3, %s1205
          %s1207 = sshll.u32 %s1197, 4
          %s1208 = int_to_ptr.vmem [resolvable:$true] %s1207
          %1213 = dma.vmem_to_hbm [thread:$0]  %s1208, 1920, %s1206, %s1194, 64, 64, 4
        $region44: #{tpu_custom_call.1} parent=31 // pred_fallthru
          _
      $region32: #{tpu_custom_call.1} parent=5 // pred_fallthru
        _
      %p1214 = scmp.le.s32.totalorder 2, %s16
      // Predicated region
      $region45: #{tpu_custom_call.1} parent=5 // pred_check
        %p1215 = pneg %p1214
      $region46: #{tpu_custom_call.1} parent=5 // pred_check_branch
        %1217 = sbr.rel (%p1215) target = $region48
      $region47: #{tpu_custom_call.1} parent=5 // pred_region
        %s1218 = ssub.s32 %s16, 2
        // Predicated region
        $region49: #{tpu_custom_call.1} parent=47 // pred_check
          %p1219 = pneg %p113
        $region50: #{tpu_custom_call.1} parent=47 // pred_check_branch
          %1221 = sbr.rel (%p1219) target = $region52
        $region51: #{tpu_custom_call.1} parent=47 // pred_region
          %s1222 = sand.u32 %s98, 1
          %s1223 = scalar_lea.sflag [#allocation4], %s1222
          %s1224 = sand.u32 %s98, 1
          %s1225 = smul.addr %s1224, 120
          %s1226 = scalar_lea.vmem [#allocation7], %s1225
          %1227 = dma.done %s1223, 1920
        $region52: #{tpu_custom_call.1} parent=47 // pred_fallthru
          _
      $region48: #{tpu_custom_call.1} parent=5 // pred_fallthru
        _
    $region6: #{tpu_custom_call.1} parent=1 // loop_footer
      %s20 = sadd.s32 1, %s16
    $region7: #{tpu_custom_call.1} parent=1 // loop_footer_branch
      %15 = sbr.rel target = $region3
    $region8: #{tpu_custom_call.1} parent=1 // loop_exit
      _
    %1228 = vsyncpa [#allocation3], 1
    %s1229 = scalar_lea.sflag [#allocation3], 1
    %1230 = vsyncpa %s1229, 1
    %1231 = vsyncpa [#allocation6], 1
    %1232 = vsyncpa [#allocation4], 1
    %s1233 = scalar_lea.sflag [#allocation4], 1
    %1234 = vsyncpa %s1233, 1

</llo_original>
